<compile_context>
chip_gen: v7x
topology: tpu7x:2x2x1
jax: 0.10.0
libtpu: 0.0.40
codegen_flags: <defaults>
</compile_context>

<pallas_src>
import functools

import jax
import jax.numpy as jnp
from jax import lax
from jax.experimental import pallas as pl
from jax.experimental.pallas import tpu as pltpu


# ----------------------------- small helpers ------------------------------

def _largest_aligned_divisor(full, target, align):
    """Largest multiple of `align` that divides `full` and is <= target.

    Returns `full` itself when full <= target or when no aligned divisor
    exists (block_shape == full array extent is always legal).
    """
    if full <= target:
        return full
    t = min(target, full)
    t -= t % align
    while t >= align:
        if full % t == 0:
            return t
        t -= align
    return full


def _dot_bf16(x, w):
    """(tm, tk) @ (tn, tk)^T on the MXU, bf16 operands, f32 accumulation."""
    return lax.dot_general(
        x.astype(jnp.bfloat16), w.astype(jnp.bfloat16),
        dimension_numbers=(((1,), (1,)), ((), ())),
        preferred_element_type=jnp.float32)


# ----------------------------- kernel bodies ------------------------------

def _standout_eval_kernel(x_ref, pi_ref, y_ref, out_ref, acc_ref, *,
                          alpha, beta, nk):
    def epilogue(logits):
        p = jax.nn.sigmoid(alpha * logits + beta)
        out_ref[...] = (p * y_ref[...]).astype(out_ref.dtype)

    if nk == 1:
        # Whole reduction resident: keep logits in vregs, skip the accumulator.
        epilogue(_dot_bf16(x_ref[...], pi_ref[...]))
        return

    k = pl.program_id(2)

    @pl.when(k == 0)
    def _():
        acc_ref[...] = jnp.zeros_like(acc_ref)

    acc_ref[...] += _dot_bf16(x_ref[...], pi_ref[...])

    @pl.when(k == nk - 1)
    def _():
        epilogue(acc_ref[...])


def _standout_train_kernel(seed_ref, x_ref, pi_ref, y_ref, out_ref, acc_ref, *,
                           alpha, beta, nk):
    """Training path on real TPU: Bernoulli mask sampled with the HW PRNG."""
    # Per-output-tile seed (independent of k). The large odd multiplier keeps
    # sequential caller seeds (s, s+1, ...) from colliding across tiles.
    tile = pl.program_id(0) * pl.num_programs(1) + pl.program_id(1)
    pltpu.prng_seed(seed_ref[0] * jnp.int32(2003750011) + tile)

    # Draw the bits before the matmul so this VPU work hides under MXU latency.
    bits = pltpu.bitcast(pltpu.prng_random_bits(out_ref.shape), jnp.uint32)
    bits24 = pltpu.bitcast(bits >> jnp.uint32(8), jnp.int32)  # uniform * 2^24

    def epilogue(logits):
        p = jax.nn.sigmoid(alpha * logits + beta)
        # Integer-domain Bernoulli compare: (u < p)  <=>  (bits24 < p * 2^24).
        thr = (p * jnp.float32(1 << 24)).astype(jnp.int32)
        out_ref[...] = jnp.where(bits24 < thr, y_ref[...],
                                 jnp.zeros_like(y_ref[...])).astype(out_ref.dtype)

    if nk == 1:
        epilogue(_dot_bf16(x_ref[...], pi_ref[...]))
        return

    k = pl.program_id(2)

    @pl.when(k == 0)
    def _():
        acc_ref[...] = jnp.zeros_like(acc_ref)

    acc_ref[...] += _dot_bf16(x_ref[...], pi_ref[...])

    @pl.when(k == nk - 1)
    def _():
        epilogue(acc_ref[...])


def _standout_train_uniform_kernel(x_ref, pi_ref, y_ref, u_ref, out_ref,
                                   acc_ref, *, alpha, beta, nk):
    """Training fallback (non-TPU / interpret): uniforms streamed as an input."""
    def epilogue(logits):
        p = jax.nn.sigmoid(alpha * logits + beta)
        out_ref[...] = jnp.where(u_ref[...] < p, y_ref[...],
                                 jnp.zeros_like(y_ref[...])).astype(out_ref.dtype)

    if nk == 1:
        epilogue(_dot_bf16(x_ref[...], pi_ref[...]))
        return

    k = pl.program_id(2)

    @pl.when(k == 0)
    def _():
        acc_ref[...] = jnp.zeros_like(acc_ref)

    acc_ref[...] += _dot_bf16(x_ref[...], pi_ref[...])

    @pl.when(k == nk - 1)
    def _():
        epilogue(acc_ref[...])


# ------------------------------- wrapper -----------------------------------

def standout_forward(inputs, outputs, pi, alpha, beta, *,
                     training=False, seed=0, tm=None, tn=None, tk=None):
    """Pallas implementation of Standout.forward (sigmoid nonlinearity).

    inputs : (B, Din) f32
    outputs: (B, Dout) f32
    pi     : (Dout, Din) f32  (nn.Linear-style weight; NOT transposed here)
    """
    B, Din = inputs.shape
    Dout = pi.shape[0]
    assert pi.shape == (Dout, Din)
    assert outputs.shape == (B, Dout)

    # ---- generation-aware VMEM budget ----
    try:
        vmem_cap = int(getattr(pltpu.get_tpu_info(), "vmem_capacity_bytes",
                               64 << 20))
    except Exception:
        vmem_cap = 64 << 20  # conservative default (v7x per-core)
    budget = int(vmem_cap * 0.55)  # headroom for compiler scratch / pipelining

    # ---- tile selection ----
    # tm: sublane dim (mult of 8 or == B); tn: lane dim of the output tile
    # (mult of 128 or == Dout) so stores stay lane-dense (unmasked vst).
    if tm is None:
        tm = _largest_aligned_divisor(B, 256, 8)
    if tn is None:
        tn = _largest_aligned_divisor(Dout, 512, 128)
    assert B % tm == 0 and Dout % tn == 0, "B/Dout must be multiples of tm/tn"
    assert tm == B or tm % 8 == 0
    assert tn == Dout or tn % 128 == 0

    if tk is None:
        # Largest lane-aligned divisor of Din whose double-buffered x/pi tiles
        # fit the budget; when Din itself fits it stays resident (nk == 1).
        avail = budget - 4 * 5 * tm * tn          # acc + 2x-buffered y/out
        tk_max = max(128, avail // (8 * (tm + tn)))
        tk = _largest_aligned_divisor(Din, tk_max, 128)
    assert Din % tk == 0
    assert tk == Din or tk % 128 == 0
    nk = Din // tk

    # ---- HBM-traffic-aware operand reuse direction ----
    # The operand whose block index is constant along the inner grid axis is
    # fetched once per outer step; the other is re-streamed.  Pick the cheaper.
    x_restream = (Dout // tn) * B * Din       # cost if pi is the reused operand
    pi_restream = (B // tm) * Dout * Din      # cost if x  is the reused operand
    reuse_weight = x_restream <= pi_restream

    if reuse_weight:
        grid = (Dout // tn, B // tm, nk)      # Dout tiles outer, B tiles inner
        x_map = lambda j, i, k, *_: (i, k)
        w_map = lambda j, i, k, *_: (j, k)
        t_map = lambda j, i, k, *_: (i, j)
    else:
        grid = (B // tm, Dout // tn, nk)      # B tiles outer, Dout tiles inner
        x_map = lambda i, j, k, *_: (i, k)
        w_map = lambda i, j, k, *_: (j, k)
        t_map = lambda i, j, k, *_: (i, j)

    x_spec = pl.BlockSpec((tm, tk), x_map)
    w_spec = pl.BlockSpec((tn, tk), w_map)
    t_spec = pl.BlockSpec((tm, tn), t_map)

    out_shape = jax.ShapeDtypeStruct((B, Dout), outputs.dtype)
    scratch = [pltpu.VMEM((tm, tn), jnp.float32)]

    # Real double-buffered footprint (f32 streamed tiles + resident acc).
    footprint = 4 * (2 * tm * tk + 2 * tn * tk + 4 * tm * tn + tm * tn)
    vmem_limit = int(min(int(vmem_cap * 0.9),
                         max(32 << 20, footprint + (8 << 20))))
    cparams = pltpu.CompilerParams(
        dimension_semantics=("parallel", "parallel", "arbitrary"),
        vmem_limit_bytes=vmem_limit)

    cost = pl.CostEstimate(
        flops=2 * B * Din * Dout,
        transcendentals=B * Dout,
        bytes_accessed=4 * (B * Din + Din * Dout + 2 * B * Dout))

    alpha = float(alpha)
    beta = float(beta)

    if not training:
        kernel = functools.partial(_standout_eval_kernel,
                                   alpha=alpha, beta=beta, nk=nk)
        grid_spec = pltpu.PrefetchScalarGridSpec(
            num_scalar_prefetch=0, grid=grid,
            in_specs=[x_spec, w_spec, t_spec], out_specs=t_spec,
            scratch_shapes=scratch)
        return pl.pallas_call(
            kernel, out_shape=out_shape, grid_spec=grid_spec,
            compiler_params=cparams, cost_estimate=cost,
        )(inputs, pi, outputs)

    if jax.default_backend() == "tpu":
        # In-kernel hardware PRNG; seed delivered via scalar prefetch (SMEM).
        kernel = functools.partial(_standout_train_kernel,
                                   alpha=alpha, beta=beta, nk=nk)
        seed_arr = jnp.array([seed], dtype=jnp.int32)
        grid_spec = pltpu.PrefetchScalarGridSpec(
            num_scalar_prefetch=1, grid=grid,
            in_specs=[x_spec, w_spec, t_spec], out_specs=t_spec,
            scratch_shapes=scratch)
        return pl.pallas_call(
            kernel, out_shape=out_shape, grid_spec=grid_spec,
            compiler_params=cparams, cost_estimate=cost,
        )(seed_arr, inputs, pi, outputs)

    # Non-TPU backend (e.g. CPU interpret check): pltpu.prng_* has no lowering
    # there, so sample the uniforms outside the kernel and stream them in.
    u = jax.random.uniform(jax.random.PRNGKey(seed), (B, Dout),
                           dtype=jnp.float32)
    kernel = functools.partial(_standout_train_uniform_kernel,
                               alpha=alpha, beta=beta, nk=nk)
    grid_spec = pltpu.PrefetchScalarGridSpec(
        num_scalar_prefetch=0, grid=grid,
        in_specs=[x_spec, w_spec, t_spec, t_spec], out_specs=t_spec,
        scratch_shapes=scratch)
    return pl.pallas_call(
        kernel, out_shape=out_shape, grid_spec=grid_spec,
        compiler_params=cparams, cost_estimate=cost,
    )(inputs, pi, outputs, u)


# --------------------------------- demo -------------------------------------

if __name__ == "__main__":
    key = jax.random.PRNGKey(0)
    k_x, k_y, k_w = jax.random.split(key, 3)

    # Small, lane-aligned shapes; chosen so both the single-shot (nk == 1) and
    # the K-tiled accumulator path (nk == 2 with tk=128) are exercised.
    B, Din, Dout = 16, 256, 256
    alpha, beta = 0.5, -0.1

    inputs = jax.random.normal(k_x, (B, Din), dtype=jnp.float32)
    outputs = jax.random.normal(k_y, (B, Dout), dtype=jnp.float32)
    pi = jax.random.normal(k_w, (Dout, Din), dtype=jnp.float32) * 0.05

    p_ref = jax.nn.sigmoid(alpha * (inputs @ pi.T) + beta)
    ref_eval = p_ref * outputs

    # --- eval mode, Din fully resident (nk == 1), explicit small tiles ---
    out_eval = standout_forward(inputs, outputs, pi, alpha, beta,
                                training=False, tm=8, tn=128)
    out_eval = jax.block_until_ready(out_eval)
    assert out_eval.shape == (B, Dout)
    # bf16 MXU operands -> a few e-4 absolute error vs the f32 reference.
    assert jnp.allclose(out_eval, ref_eval, atol=1e-2, rtol=1e-2), "eval mismatch"

    # --- eval mode, K-tiled reduction (tk=128 -> nk=2, VMEM f32 accumulator) ---
    out_eval_kt = standout_forward(inputs, outputs, pi, alpha, beta,
                                   training=False, tm=8, tn=128, tk=128)
    out_eval_kt = jax.block_until_ready(out_eval_kt)
    assert jnp.allclose(out_eval_kt, ref_eval, atol=1e-2, rtol=1e-2), \
        "k-tiled eval mismatch"

    # --- training mode (default auto tiles): out = bernoulli(p) * outputs ---
    out_train = standout_forward(inputs, outputs, pi, alpha, beta,
                                 training=True, seed=1234)
    out_train = jax.block_until_ready(out_train)
    assert out_train.shape == (B, Dout)
    # Each element is either 0 or the corresponding `outputs` element.
    is_zero = jnp.isclose(out_train, 0.0)
    is_copy = jnp.isclose(out_train, outputs)
    assert bool(jnp.all(is_zero | is_copy)), "training mask semantics violated"

    print("KERNEL_OK")
</pallas_src>

<mosaic_0001>
module attributes {stable_mosaic.version = 11 : i64} {
  func.func @_standout_eval_kernel(%arg0: i32, %arg1: i32, %arg2: i32, %arg3: memref<8x256xf32, #tpu.memory_space<vmem>>, %arg4: memref<128x256xf32, #tpu.memory_space<vmem>>, %arg5: memref<8x128xf32, #tpu.memory_space<vmem>>, %arg6: memref<8x128xf32, #tpu.memory_space<vmem>>, %arg7: memref<8x128xf32, #tpu.memory_space<vmem>>) attributes {dimension_semantics = [#tpu.dimension_semantics<parallel>, #tpu.dimension_semantics<parallel>, #tpu.dimension_semantics<arbitrary>], iteration_bounds = array<i64: 2, 2, 1>, scalar_prefetch = 0 : i64, scratch_operands = 1 : i64, tpu.core_type = #tpu.core_type<tc>, window_params = [{transform_indices = @transform_0, window_bounds = array<i64: 8, 256>}, {transform_indices = @transform_1, window_bounds = array<i64: 128, 256>}, {transform_indices = @transform_2, window_bounds = array<i64: 8, 128>}, {transform_indices = @transform_3, window_bounds = array<i64: 8, 128>}]} {
    %c0 = arith.constant 0 : index
    %c0_0 = arith.constant 0 : index
    %0 = vector.load %arg3[%c0, %c0_0] : memref<8x256xf32, #tpu.memory_space<vmem>>, vector<8x256xf32>
    %c0_1 = arith.constant 0 : index
    %c0_2 = arith.constant 0 : index
    %1 = vector.load %arg4[%c0_1, %c0_2] : memref<128x256xf32, #tpu.memory_space<vmem>>, vector<128x256xf32>
    %2 = arith.truncf %0 : vector<8x256xf32> to vector<8x256xbf16>
    %3 = arith.truncf %1 : vector<128x256xf32> to vector<128x256xbf16>
    %cst = arith.constant dense<0.000000e+00> : vector<8x128xf32>
    %4 = tpu.matmul %2, %3, %cst {dimension_numbers = #tpu.dot_dimension_numbers<[1], [1], [0], [0], [0, 0, 1, 0], [], []>} : vector<8x256xbf16>, vector<128x256xbf16>, vector<8x128xf32> -> vector<8x128xf32>
    %cst_3 = arith.constant 5.000000e-01 : f32
    %5 = vector.broadcast %cst_3 : f32 to vector<8x128xf32>
    %6 = arith.mulf %5, %4 : vector<8x128xf32>
    %cst_4 = arith.constant -1.000000e-01 : f32
    %7 = vector.broadcast %cst_4 : f32 to vector<8x128xf32>
    %8 = arith.addf %6, %7 : vector<8x128xf32>
    %9 = arith.negf %8 : vector<8x128xf32>
    %10 = math.exp %9 : vector<8x128xf32>
    %cst_5 = arith.constant 1.000000e+00 : f32
    %11 = vector.broadcast %cst_5 : f32 to vector<8x128xf32>
    %12 = arith.addf %11, %10 : vector<8x128xf32>
    %13 = arith.divf %11, %12 : vector<8x128xf32>
    %c0_6 = arith.constant 0 : index
    %c0_7 = arith.constant 0 : index
    %14 = vector.load %arg5[%c0_6, %c0_7] : memref<8x128xf32, #tpu.memory_space<vmem>>, vector<8x128xf32>
    %15 = arith.mulf %13, %14 : vector<8x128xf32>
    %c0_8 = arith.constant 0 : index
    %c0_9 = arith.constant 0 : index
    %16 = vector.load %arg6[%c0_8, %c0_9] : memref<8x128xf32, #tpu.memory_space<vmem>>, vector<8x128xf32>
    tpu.vector_store %arg6[%c0_8, %c0_9], %15 {strides = array<i32>} : memref<8x128xf32, #tpu.memory_space<vmem>>, vector<8x128xf32>,
    return
  }
  func.func @transform_0(%arg0: i32, %arg1: i32, %arg2: i32) -> (i32, i32) {
    %c0_i32 = arith.constant 0 : i32
    return %arg1, %arg2 : i32, i32
  }
  func.func @transform_1(%arg0: i32, %arg1: i32, %arg2: i32) -> (i32, i32) {
    %c0_i32 = arith.constant 0 : i32
    return %arg0, %arg2 : i32, i32
  }
  func.func @transform_2(%arg0: i32, %arg1: i32, %arg2: i32) -> (i32, i32) {
    %c0_i32 = arith.constant 0 : i32
    return %arg1, %arg0 : i32, i32
  }
  func.func @transform_3(%arg0: i32, %arg1: i32, %arg2: i32) -> (i32, i32) {
    %c0_i32 = arith.constant 0 : i32
    return %arg1, %arg0 : i32, i32
  }
}

</mosaic_0001>

<llo_original>
// kernel: tpu_custom_call.1
$region0: #{tpu_custom_call.1}
  #allocation0 [shape = 'u32[]', space=smem, size = 0x4, offset = 0x4, fixed_abs, tag = 'smem constant byte address 0x4 - core index']
  #allocation1 [shape = 'u32[144,128]{1,0:T(1,128)}', space=vmem, size = 0x12000, scoped, tag = 'internal scratch']
  #allocation2 [shape = 'f32[8,128]{1,0:T(8,128)}', space=vmem, size = 0x1000, scoped, tag = 'scratch operand']
  %s0 = inlined_call_operand.hbm [shape: f32[16,256], index: 0, kind: input, shape index: {}]
  %s1 = inlined_call_operand.hbm [shape: f32[256,256], index: 1, kind: input, shape index: {}]
  %s2 = inlined_call_operand.hbm [shape: f32[16,256], index: 2, kind: input, shape index: {}]
  %s3 = inlined_call_operand.hbm [shape: f32[16,256], index: 3, kind: output, shape index: {}]
  %s4 = sld [smem:[#allocation0]]
  $region57: #{tpu_custom_call.1} parent=0
    _
  %s6 = ssub.s32 1, %s4
  %s7 = scalar_select 0, %s6, %s4
  $region1: #{tpu_custom_call.1} parent=0
    #allocation3 [shape = 'u8[16384]{0}', space=vmem, size = 0x4000, scoped, tag = 'input window, operand 0']
    #allocation4 [shape = 's32[2]{0}', space=sflag, size = 0x8, scoped, tag = 'scoped memory for tpu_custom_call.1']
    #allocation5 [shape = 's32[2]{0}', space=sflag, size = 0x8, scoped, tag = 'scoped memory for tpu_custom_call.1']
    #allocation6 [shape = 'u8[262144]{0}', space=vmem, size = 0x40000, scoped, tag = 'input window, operand 1']
    #allocation7 [shape = 's32[2]{0}', space=sflag, size = 0x8, scoped, tag = 'scoped memory for tpu_custom_call.1']
    #allocation8 [shape = 'u8[8192]{0}', space=vmem, size = 0x2000, scoped, tag = 'input window, operand 2']
    #allocation9 [shape = 'u8[8192]{0}', space=vmem, size = 0x2000, scoped, tag = 'output window, operand 0']
    %8 = vsyncpa [#allocation4], 0
    %s9 = scalar_lea.sflag [#allocation4], 1
    %10 = vsyncpa %s9, 0
    %11 = vsyncpa [#allocation7], 0
    %s12 = scalar_lea.sflag [#allocation7], 1
    %13 = vsyncpa %s12, 0
    %14 = vsyncpa [#allocation5], 0
    %s15 = scalar_lea.sflag [#allocation5], 1
    %16 = vsyncpa %s15, 0
    loop: start=0, step=1, limit=6
    $region2: #{tpu_custom_call.1} parent=1 // loop_pre_header
      _
    $region3: #{tpu_custom_call.1} parent=1 // loop_header
      %s18 = sphi 0, %s22
      %p19 = scmp.ge.s32.totalorder %s18, 6
      %s25 = sphi 0, %s44
      %s26 = sphi 0, %s40
      %s27 = sphi 0, %s36
      %s28 = sphi 0, %s25
      %s29 = sphi 0, %s26
      %s30 = sphi 0, %s27
      %s31 = sphi 0, %s28
      %s32 = sphi 0, %s29
      %s33 = sphi 0, %s30
      %s49 = sphi 0, %s51
      %s52 = sphi 0, %s49
      %s53 = sphi 0, %s52
      %s69 = sphi 0, %s53
      %s77 = sphi 0, %s79
      %s80 = sphi 0, %s77
      %s81 = sphi 0, %s80
      %s97 = sphi 0, %s81
      %s105 = sphi 0, %s107
      %s108 = sphi 0, %s105
      %s109 = sphi 0, %s108
      %s125 = sphi 0, %s109
      %s133 = sphi 0, %s135
      %s136 = sphi 0, %s133
      %s137 = sphi 0, %s136
      %s153 = sphi 0, %s137
    $region4: #{tpu_custom_call.1} parent=1 // loop_header_branch
      %21 = sbr.rel (%p19) target = $region8
    $region5: #{tpu_custom_call.1} parent=1 // loop_body
      %s23 = ssub.s32 %s18, 1
      %s24 = ssub.s32 %s18, 2
      %s34 = sadd.s32 1, %s27
      %p35 = scmp.ge.s32.totalorder %s34, 1
      %s36 = scalar_select %p35, 0, %s34
      %s37 = sadd.s32 1, %s26
      %s38 = scalar_select %p35, %s37, %s26
      %p39 = scmp.ge.s32.totalorder %s38, 2
      %s40 = scalar_select %p39, 0, %s38
      %s41 = sadd.s32 1, %s25
      %s42 = scalar_select %p39, %s41, %s25
      %p43 = scmp.ge.s32.totalorder %s42, 2
      %s44 = scalar_select %p43, 0, %s42
      %s45 = ssub.s32 %s26, %s40
      %s46 = ssub.s32 %s27, %s36
      %s47 = sor.u32 %s45, %s46
      %p48 = scmp.eq.s32.totalorder %s47, 0
      %s50 = sadd.s32 %s49, 1
      %s51 = scalar_select %p48, %s49, %s50
      %p54 = pneg %p48
      %p55 = scmp.eq.s32.totalorder %s18, 3
      %p56 = por %p54, %p55
      %p57 = scmp.ne.s32.totalorder %s49, %s52
      %p58 = scmp.eq.s32.totalorder %s18, 0
      %p59 = por %p57, %p58
      %p60 = scmp.ne.s32.totalorder %s49, %s52
      %p61 = scmp.eq.s32.totalorder %s23, 3
      %p62 = por %p60, %p61
      %p63 = scmp.ne.s32.totalorder %s52, %s53
      %p64 = scmp.eq.s32.totalorder %s23, 0
      %p65 = por %p63, %p64
      %p66 = scmp.ne.s32.totalorder %s52, %s53
      %p67 = scmp.eq.s32.totalorder %s24, 3
      %p68 = por %p66, %p67
      %p70 = scmp.ne.s32.totalorder %s53, %s69
      %p71 = scmp.eq.s32.totalorder %s24, 0
      %p72 = por %p70, %p71
      %s73 = ssub.s32 %s25, %s44
      %s74 = ssub.s32 %s27, %s36
      %s75 = sor.u32 %s73, %s74
      %p76 = scmp.eq.s32.totalorder %s75, 0
      %s78 = sadd.s32 %s77, 1
      %s79 = scalar_select %p76, %s77, %s78
      %p82 = pneg %p76
      %p83 = scmp.eq.s32.totalorder %s18, 3
      %p84 = por %p82, %p83
      %p85 = scmp.ne.s32.totalorder %s77, %s80
      %p86 = scmp.eq.s32.totalorder %s18, 0
      %p87 = por %p85, %p86
      %p88 = scmp.ne.s32.totalorder %s77, %s80
      %p89 = scmp.eq.s32.totalorder %s23, 3
      %p90 = por %p88, %p89
      %p91 = scmp.ne.s32.totalorder %s80, %s81
      %p92 = scmp.eq.s32.totalorder %s23, 0
      %p93 = por %p91, %p92
      %p94 = scmp.ne.s32.totalorder %s80, %s81
      %p95 = scmp.eq.s32.totalorder %s24, 3
      %p96 = por %p94, %p95
      %p98 = scmp.ne.s32.totalorder %s81, %s97
      %p99 = scmp.eq.s32.totalorder %s24, 0
      %p100 = por %p98, %p99
      %s101 = ssub.s32 %s26, %s40
      %s102 = ssub.s32 %s25, %s44
      %s103 = sor.u32 %s101, %s102
      %p104 = scmp.eq.s32.totalorder %s103, 0
      %s106 = sadd.s32 %s105, 1
      %s107 = scalar_select %p104, %s105, %s106
      %p110 = pneg %p104
      %p111 = scmp.eq.s32.totalorder %s18, 3
      %p112 = por %p110, %p111
      %p113 = scmp.ne.s32.totalorder %s105, %s108
      %p114 = scmp.eq.s32.totalorder %s18, 0
      %p115 = por %p113, %p114
      %p116 = scmp.ne.s32.totalorder %s105, %s108
      %p117 = scmp.eq.s32.totalorder %s23, 3
      %p118 = por %p116, %p117
      %p119 = scmp.ne.s32.totalorder %s108, %s109
      %p120 = scmp.eq.s32.totalorder %s23, 0
      %p121 = por %p119, %p120
      %p122 = scmp.ne.s32.totalorder %s108, %s109
      %p123 = scmp.eq.s32.totalorder %s24, 3
      %p124 = por %p122, %p123
      %p126 = scmp.ne.s32.totalorder %s109, %s125
      %p127 = scmp.eq.s32.totalorder %s24, 0
      %p128 = por %p126, %p127
      %s129 = ssub.s32 %s26, %s40
      %s130 = ssub.s32 %s25, %s44
      %s131 = sor.u32 %s129, %s130
      %p132 = scmp.eq.s32.totalorder %s131, 0
      %s134 = sadd.s32 %s133, 1
      %s135 = scalar_select %p132, %s133, %s134
      %p138 = pneg %p132
      %p139 = scmp.eq.s32.totalorder %s18, 3
      %p140 = por %p138, %p139
      %p141 = scmp.ne.s32.totalorder %s133, %s136
      %p142 = scmp.eq.s32.totalorder %s18, 0
      %p143 = por %p141, %p142
      %p144 = scmp.ne.s32.totalorder %s133, %s136
      %p145 = scmp.eq.s32.totalorder %s23, 3
      %p146 = por %p144, %p145
      %p147 = scmp.ne.s32.totalorder %s136, %s137
      %p148 = scmp.eq.s32.totalorder %s23, 0
      %p149 = por %p147, %p148
      %p150 = scmp.ne.s32.totalorder %s136, %s137
      %p151 = scmp.eq.s32.totalorder %s24, 3
      %p152 = por %p150, %p151
      %p154 = scmp.ne.s32.totalorder %s137, %s153
      %p155 = scmp.eq.s32.totalorder %s24, 0
      %p156 = por %p154, %p155
      %p157 = scmp.le.s32.totalorder 1, %s18
      %p158 = scmp.lt.s32.totalorder %s18, 5
      %p159 = pnand %p157, %p158
      %p160 = pneg %p159
      // Predicated region
      $region9: #{tpu_custom_call.1} parent=5 // pred_check
        _
      $region10: #{tpu_custom_call.1} parent=5 // pred_check_branch
        %162 = sbr.rel (%p159) target = $region12
      $region11: #{tpu_custom_call.1} parent=5 // pred_region
        %s163 = ssub.s32 %s18, 1
      $region12: #{tpu_custom_call.1} parent=5 // pred_fallthru
        _
      %p164 = scmp.lt.s32.totalorder %s18, 4
      // Predicated region
      $region13: #{tpu_custom_call.1} parent=5 // pred_check
        %p165 = pneg %p164
      $region14: #{tpu_custom_call.1} parent=5 // pred_check_branch
        %167 = sbr.rel (%p165) target = $region16
      $region15: #{tpu_custom_call.1} parent=5 // pred_region
        // Predicated region
        $region17: #{tpu_custom_call.1} parent=15 // pred_check
          %p168 = pneg %p59
        $region18: #{tpu_custom_call.1} parent=15 // pred_check_branch
          %170 = sbr.rel (%p168) target = $region20
        $region19: #{tpu_custom_call.1} parent=15 // pred_region
          %s171 = sand.u32 %s49, 1
          %s172 = scalar_lea.sflag [#allocation4], %s171
          %s173 = sand.u32 %s49, 1
          %s174 = smul.addr %s173, 16
          %s175 = scalar_lea.vmem [#allocation3], %s174
          %s176 = smul.u32 2, %s27
          %s178 = ssub.s32 256, 256
          %179 = vsyncadd %s172, %s178
          %s180 = smul.addr %s26, 2
          %s181 = sadd.s32 %s176, %s180
          %s182 = smul.addr %s181, 128
          %s183 = scalar_lea.hbm %s0, %s182
          %s185 = sshll.u32 %s175, 4
          %s186 = int_to_ptr.vmem [resolvable:$true] %s185
          %188 = dma.hbm_to_vmem [thread:$0]  %s183, 256, %s186, %s172
        $region20: #{tpu_custom_call.1} parent=15 // pred_fallthru
          _
        // Predicated region
        $region21: #{tpu_custom_call.1} parent=15 // pred_check
          %p189 = pneg %p87
        $region22: #{tpu_custom_call.1} parent=15 // pred_check_branch
          %191 = sbr.rel (%p189) target = $region24
        $region23: #{tpu_custom_call.1} parent=15 // pred_region
          %s192 = sand.u32 %s18, 1
          %s193 = scalar_lea.sflag [#allocation7], %s192
          %s194 = sand.u32 %s77, 1
          %s195 = smul.addr %s194, 256
          %s196 = scalar_lea.vmem [#allocation6], %s195
          %s197 = smul.u32 16, %s25
          %s198 = smul.u32 2, %s27
          %s200 = ssub.s32 4096, 4096
          %201 = vsyncadd %s193, %s200
          %s202 = smul.addr %s197, 2
          %s203 = sadd.s32 %s198, %s202
          %s204 = smul.addr %s203, 128
          %s205 = scalar_lea.hbm %s1, %s204
          %s206 = sshll.u32 %s196, 4
          %s207 = int_to_ptr.vmem [resolvable:$true] %s206
          %212 = dma.hbm_to_vmem [thread:$0]  %s205, 4096, %s207, %s193, 256, 256, 16
        $region24: #{tpu_custom_call.1} parent=15 // pred_fallthru
          _
        // Predicated region
        $region25: #{tpu_custom_call.1} parent=15 // pred_check
          %p213 = pneg %p115
        $region26: #{tpu_custom_call.1} parent=15 // pred_check_branch
          %215 = sbr.rel (%p213) target = $region28
        $region27: #{tpu_custom_call.1} parent=15 // pred_region
          %s216 = sand.u32 %s18, 1
          %s217 = scalar_lea.sflag [#allocation7], %s216
          %s218 = sand.u32 %s105, 1
          %s219 = smul.addr %s218, 8
          %s220 = scalar_lea.vmem [#allocation8], %s219
          %s222 = ssub.s32 128, 128
          %223 = vsyncadd %s217, %s222
          %s224 = smul.addr %s26, 2
          %s225 = sadd.s32 %s25, %s224
          %s226 = smul.addr %s225, 128
          %s227 = scalar_lea.hbm %s2, %s226
          %s229 = sshll.u32 %s220, 4
          %s230 = int_to_ptr.vmem [resolvable:$true] %s229
          %232 = dma.hbm_to_vmem [thread:$0]  %s227, 128, %s230, %s217
        $region28: #{tpu_custom_call.1} parent=15 // pred_fallthru
          _
      $region16: #{tpu_custom_call.1} parent=5 // pred_fallthru
        _
      %p233 = scmp.le.s32.totalorder 1, %s18
      %p234 = scmp.lt.s32.totalorder %s18, 5
      %p235 = pnand %p233, %p234
      %p236 = pneg %p235
      // Predicated region
      $region29: #{tpu_custom_call.1} parent=5 // pred_check
        _
      $region30: #{tpu_custom_call.1} parent=5 // pred_check_branch
        %238 = sbr.rel (%p235) target = $region32
      $region31: #{tpu_custom_call.1} parent=5 // pred_region
        %s239 = ssub.s32 %s18, 1
        %s240 = sand.u32 %s52, 1
        %s241 = scalar_lea.sflag [#allocation4], %s240
        %s242 = sand.u32 %s52, 1
        %s243 = smul.addr %s242, 16
        %s244 = scalar_lea.vmem [#allocation3], %s243
        // Predicated region
        $region33: #{tpu_custom_call.1} parent=31 // pred_check
          %p245 = pneg %p65
        $region34: #{tpu_custom_call.1} parent=31 // pred_check_branch
          %247 = sbr.rel (%p245) target = $region36
        $region35: #{tpu_custom_call.1} parent=31 // pred_region
          %248 = dma.done %s241, 256
        $region36: #{tpu_custom_call.1} parent=31 // pred_fallthru
          _
        %s249 = sand.u32 %s23, 1
        %s250 = scalar_lea.sflag [#allocation7], %s249
        %s251 = sand.u32 %s80, 1
        %s252 = smul.addr %s251, 256
        %s253 = scalar_lea.vmem [#allocation6], %s252
        // Predicated region
        $region37: #{tpu_custom_call.1} parent=31 // pred_check
          %p254 = pneg %p93
        $region38: #{tpu_custom_call.1} parent=31 // pred_check_branch
          %256 = sbr.rel (%p254) target = $region40
        $region39: #{tpu_custom_call.1} parent=31 // pred_region
          %257 = dma.done %s250, 4096
        $region40: #{tpu_custom_call.1} parent=31 // pred_fallthru
          _
        %s258 = sand.u32 %s23, 1
        %s259 = scalar_lea.sflag [#allocation7], %s258
        %s260 = sand.u32 %s108, 1
        %s261 = smul.addr %s260, 8
        %s262 = scalar_lea.vmem [#allocation8], %s261
        // Predicated region
        $region41: #{tpu_custom_call.1} parent=31 // pred_check
          %p263 = pneg %p121
        $region42: #{tpu_custom_call.1} parent=31 // pred_check_branch
          %265 = sbr.rel (%p263) target = $region44
        $region43: #{tpu_custom_call.1} parent=31 // pred_region
          %266 = dma.done %s259, 128
        $region44: #{tpu_custom_call.1} parent=31 // pred_fallthru
          _
        %s267 = sand.u32 %s52, 1
        %s268 = scalar_lea.sflag [#allocation4], %s267
        %s269 = sand.u32 %s52, 1
        %s270 = smul.addr %s269, 16
        %s271 = scalar_lea.vmem [#allocation3], %s270
        %p272 = pneg %p65
        %p273 = pneg %p62
        %s274 = sand.u32 %s23, 1
        %s275 = scalar_lea.sflag [#allocation7], %s274
        %s276 = sand.u32 %s80, 1
        %s277 = smul.addr %s276, 256
        %s278 = scalar_lea.vmem [#allocation6], %s277
        %p279 = pneg %p93
        %p280 = pneg %p90
        %s281 = sand.u32 %s23, 1
        %s282 = scalar_lea.sflag [#allocation7], %s281
        %s283 = sand.u32 %s108, 1
        %s284 = smul.addr %s283, 8
        %s285 = scalar_lea.vmem [#allocation8], %s284
        %p286 = pneg %p121
        %p287 = pneg %p118
        %p288 = pneg %p149
        %p289 = pneg %p146
        %s290 = sand.u32 %s136, 1
        %s291 = scalar_lea.sflag [#allocation5], %s290
        %s292 = sand.u32 %s136, 1
        %s293 = smul.addr %s292, 8
        %s294 = scalar_lea.vmem [#allocation9], %s293
        %s295 = smul.u32 2, %s30
        %s296 = smul.u32 16, %s28
        %s297 = smul.u32 2, %s30
        %v299 = vld [vmem:[%s244] sm:$0xff]
        %v300 = vld [vmem:[%s244 + $0x8] sm:$0xff]
        %v301 = vld [vmem:[%s253] sm:$0xff]
        %v302 = vld [vmem:[%s253 + $0x8] sm:$0xff]
        %v303 = vld [vmem:[%s253 + $0x10] sm:$0xff]
        %v304 = vld [vmem:[%s253 + $0x18] sm:$0xff]
        %v305 = vld [vmem:[%s253 + $0x20] sm:$0xff]
        %v306 = vld [vmem:[%s253 + $0x28] sm:$0xff]
        %v307 = vld [vmem:[%s253 + $0x30] sm:$0xff]
        %v308 = vld [vmem:[%s253 + $0x38] sm:$0xff]
        %v309 = vld [vmem:[%s253 + $0x40] sm:$0xff]
        %v310 = vld [vmem:[%s253 + $0x48] sm:$0xff]
        %v311 = vld [vmem:[%s253 + $0x50] sm:$0xff]
        %v312 = vld [vmem:[%s253 + $0x58] sm:$0xff]
        %v313 = vld [vmem:[%s253 + $0x60] sm:$0xff]
        %v314 = vld [vmem:[%s253 + $0x68] sm:$0xff]
        %v315 = vld [vmem:[%s253 + $0x70] sm:$0xff]
        %v316 = vld [vmem:[%s253 + $0x78] sm:$0xff]
        %v317 = vld [vmem:[%s253 + $0x80] sm:$0xff]
        %v318 = vld [vmem:[%s253 + $0x88] sm:$0xff]
        %v319 = vld [vmem:[%s253 + $0x90] sm:$0xff]
        %v320 = vld [vmem:[%s253 + $0x98] sm:$0xff]
        %v321 = vld [vmem:[%s253 + $0xa0] sm:$0xff]
        %v322 = vld [vmem:[%s253 + $0xa8] sm:$0xff]
        %v323 = vld [vmem:[%s253 + $0xb0] sm:$0xff]
        %v324 = vld [vmem:[%s253 + $0xb8] sm:$0xff]
        %v325 = vld [vmem:[%s253 + $0xc0] sm:$0xff]
        %v326 = vld [vmem:[%s253 + $0xc8] sm:$0xff]
        %v327 = vld [vmem:[%s253 + $0xd0] sm:$0xff]
        %v328 = vld [vmem:[%s253 + $0xd8] sm:$0xff]
        %v329 = vld [vmem:[%s253 + $0xe0] sm:$0xff]
        %v330 = vld [vmem:[%s253 + $0xe8] sm:$0xff]
        %v331 = vld [vmem:[%s253 + $0xf0] sm:$0xff]
        %v332 = vld [vmem:[%s253 + $0xf8] sm:$0xff]
        %v333 = vpack.c.bf16 %v299, %v299
        %v334 = vpack.c.bf16 %v300, %v300
        %v335 = vpack.c.bf16 %v303, %v301
        %v336 = vpack.c.bf16 %v304, %v302
        %v337 = vpack.c.bf16 %v307, %v305
        %v338 = vpack.c.bf16 %v308, %v306
        %v339 = vpack.c.bf16 %v311, %v309
        %v340 = vpack.c.bf16 %v312, %v310
        %v341 = vpack.c.bf16 %v315, %v313
        %v342 = vpack.c.bf16 %v316, %v314
        %v343 = vpack.c.bf16 %v319, %v317
        %v344 = vpack.c.bf16 %v320, %v318
        %v345 = vpack.c.bf16 %v323, %v321
        %v346 = vpack.c.bf16 %v324, %v322
        %v347 = vpack.c.bf16 %v327, %v325
        %v348 = vpack.c.bf16 %v328, %v326
        %v349 = vpack.c.bf16 %v331, %v329
        %v350 = vpack.c.bf16 %v332, %v330
        %351 = vmatprep.subr.bf16.mxu0 %v336
        %352 = vmatpush1.bf16.xpose.msra.mxu0 %v335
        %353 = vmatprep.subr.bf16.mxu0 %v338
        %354 = vmatpush1.bf16.xpose.msra.mxu0 %v337
        %355 = vmatprep.subr.bf16.mxu0 %v340
        %356 = vmatpush1.bf16.xpose.msra.mxu0 %v339
        %357 = vmatprep.subr.bf16.mxu0 %v342
        %358 = vmatpush1.bf16.xpose.msra.mxu0 %v341
        %359 = vmatprep.subr.bf16.mxu0 %v344
        %360 = vmatpush1.bf16.xpose.msra.mxu0 %v343
        %361 = vmatprep.subr.bf16.mxu0 %v346
        %362 = vmatpush1.bf16.xpose.msra.mxu0 %v345
        %363 = vmatprep.subr.bf16.mxu0 %v348
        %364 = vmatpush1.bf16.xpose.msra.mxu0 %v347
        %365 = vmatprep.subr.bf16.mxu0 %v350
        %366 = vmatpush1.bf16.xpose.msra.mxu0 %v349
        %367 = vmatprep.subr.bf16.mxu0 0
        %368 = vmatpush1.bf16.xpose.msra.mxu0 0
        %369 = vmatprep.subr.bf16.mxu0 0
        %370 = vmatpush1.bf16.xpose.msra.mxu0 0
        %371 = vmatprep.subr.bf16.mxu0 0
        %372 = vmatpush1.bf16.xpose.msra.mxu0 0
        %373 = vmatprep.subr.bf16.mxu0 0
        %374 = vmatpush1.bf16.xpose.msra.mxu0 0
        %375 = vmatprep.subr.bf16.mxu0 0
        %376 = vmatpush1.bf16.xpose.msra.mxu0 0
        %377 = vmatprep.subr.bf16.mxu0 0
        %378 = vmatpush1.bf16.xpose.msra.mxu0 0
        %379 = vmatprep.subr.bf16.mxu0 0
        %380 = vmatpush1.bf16.xpose.msra.mxu0 0
        %381 = vmatprep.subr.bf16.mxu0 0
        %382 = vmatpush1.bf16.xpose.msra.mxu0 0
        %383 = vmatprep.mubr.bf16.mxu0 %v334
        %384 = vmatmul.mubr.bf16.gmra.mrb[0].mxu0 %v333
        %v385 = vpop.f32.mrb[0].mxu0
        %v386 = vadd.f32 0.0, %v385
        %v387 = vpop.f32.mrb[0].mxu0
        %v388 = vpop.f32.mrb[0].mxu0
        %v389 = vpop.f32.mrb[0].mxu0
        %390 = vdwg.mxu0
        %v391 = vmul.f32 %v386, 0.5
        %v392 = vadd.f32 %v391, -0.1
        %v393 = vxor.u32 %v392, 2147483648
        %v394 = vmul.f32 %v393, 1.442695
        %v395 = vpow.pop %v394
        %v396 = vadd.f32 %v395, 1.0
        %v397 = vrcp.pop %v396
        %v398 = vmul.f32 1.0, %v397
        %v399 = vld [vmem:[%s262] sm:$0xff]
        %v400 = vmul.f32 %v398, %v399
        %401 = vst [vmem:[%s294] sm:$0xff] %v400
        %s402 = sand.u32 %s136, 1
        %s403 = scalar_lea.sflag [#allocation5], %s402
        %s404 = sand.u32 %s136, 1
        %s405 = smul.addr %s404, 8
        %s406 = scalar_lea.vmem [#allocation9], %s405
        // Predicated region
        $region45: #{tpu_custom_call.1} parent=31 // pred_check
          %p407 = pneg %p146
        $region46: #{tpu_custom_call.1} parent=31 // pred_check_branch
          %409 = sbr.rel (%p407) target = $region48
        $region47: #{tpu_custom_call.1} parent=31 // pred_region
          %s411 = ssub.s32 128, 128
          %412 = vsyncadd %s403, %s411
          %s413 = smul.addr %s29, 2
          %s414 = sadd.s32 %s28, %s413
          %s415 = smul.addr %s414, 128
          %s416 = scalar_lea.hbm %s3, %s415
          %s418 = sshll.u32 %s406, 4
          %s419 = int_to_ptr.vmem [resolvable:$true] %s418
          %421 = dma.vmem_to_hbm [thread:$0]  %s419, 128, %s416, %s403
        $region48: #{tpu_custom_call.1} parent=31 // pred_fallthru
          _
      $region32: #{tpu_custom_call.1} parent=5 // pred_fallthru
        _
      %p422 = scmp.le.s32.totalorder 2, %s18
      // Predicated region
      $region49: #{tpu_custom_call.1} parent=5 // pred_check
        %p423 = pneg %p422
      $region50: #{tpu_custom_call.1} parent=5 // pred_check_branch
        %425 = sbr.rel (%p423) target = $region52
      $region51: #{tpu_custom_call.1} parent=5 // pred_region
        %s426 = ssub.s32 %s18, 2
        // Predicated region
        $region53: #{tpu_custom_call.1} parent=51 // pred_check
          %p427 = pneg %p152
        $region54: #{tpu_custom_call.1} parent=51 // pred_check_branch
          %429 = sbr.rel (%p427) target = $region56
        $region55: #{tpu_custom_call.1} parent=51 // pred_region
          %s430 = sand.u32 %s137, 1
          %s431 = scalar_lea.sflag [#allocation5], %s430
          %s432 = sand.u32 %s137, 1
          %s433 = smul.addr %s432, 8
          %s434 = scalar_lea.vmem [#allocation9], %s433
          %435 = dma.done %s431, 128
        $region56: #{tpu_custom_call.1} parent=51 // pred_fallthru
          _
      $region52: #{tpu_custom_call.1} parent=5 // pred_fallthru
        _
    $region6: #{tpu_custom_call.1} parent=1 // loop_footer
      %s22 = sadd.s32 1, %s18
    $region7: #{tpu_custom_call.1} parent=1 // loop_footer_branch
      %17 = sbr.rel target = $region3
    $region8: #{tpu_custom_call.1} parent=1 // loop_exit
      _
    %436 = vsyncpa [#allocation4], 1
    %s437 = scalar_lea.sflag [#allocation4], 1
    %438 = vsyncpa %s437, 1
    %439 = vsyncpa [#allocation7], 1
    %s440 = scalar_lea.sflag [#allocation7], 1
    %441 = vsyncpa %s440, 1
    %442 = vsyncpa [#allocation5], 1
    %s443 = scalar_lea.sflag [#allocation5], 1
    %444 = vsyncpa %s443, 1

</llo_original>
